<compile_context>
chip_gen: v5e
topology: v5e:2x2
jax: 0.10.0
libtpu: 0.0.40
codegen_flags: <defaults>
</compile_context>

<pallas_src>
import jax
import jax.numpy as jnp
from jax.experimental import pallas as pl
from jax.experimental.pallas import tpu as pltpu


def _round_up(n, m):
    return ((n + m - 1) // m) * m


def _elu(x):
    # ELU(alpha=1): x if x > 0 else exp(x) - 1  (clamp arg so dead lanes can't inf)
    return jnp.where(x > 0, x, jnp.exp(jnp.minimum(x, 0.0)) - 1.0)


def _make_encoder_kernel(n_linears, z_dim):
    """Kernel for an MLP with `n_linears` Linear layers (ELU between), fused head."""

    def kernel(*refs):
        x_ref = refs[0]
        param_refs = refs[1 : 1 + 2 * n_linears]
        out_ref = refs[1 + 2 * n_linears]

        h = x_ref[...].astype(jnp.float32)
        for i in range(n_linears):
            w = param_refs[2 * i][...].astype(jnp.float32)
            b = param_refs[2 * i + 1][...].astype(jnp.float32)  # (1, out)
            h = jnp.dot(h, w, preferred_element_type=jnp.float32) + b
            if i < n_linears - 1:
                h = _elu(h)

        # Fused head: exp() only on the upper z_dim lanes, via lane mask — avoids
        # an in-kernel cross-lane slice; the actual split happens in the wrapper.
        col = jax.lax.broadcasted_iota(jnp.int32, h.shape, 1)
        out_ref[...] = jnp.where(col < z_dim, h, jnp.exp(h)).astype(out_ref.dtype)

    return kernel


def encoder_forward(x, params, z_dim, *, batch_tile=256):
    """x: (B, x_dim) f32.  params: list of (W, b) with W (in, out), b (1, out)."""
    n_linears = len(params)
    B, x_dim = x.shape
    out_dim = params[-1][0].shape[1]  # == 2 * z_dim

    # Batch tile: multiple of 8 (sublane rule), capped so each tile (plus the
    # double-buffered output) comfortably fits scoped VMEM on all generations
    # (incl. v7x's 64 MiB physical / 32 MiB scoped).
    tb = min(batch_tile, _round_up(B, 8))
    b_pad = _round_up(B, tb)
    if b_pad != B:
        x = jnp.pad(x, ((0, b_pad - B), (0, 0)))

    flat_params = []
    for w, b in params:
        flat_params.append(w)
        flat_params.append(b)

    # x tile marches over the batch; weights/biases have constant index_maps so
    # they stay VMEM-resident across grid steps.
    in_specs = [pl.BlockSpec((tb, x_dim), lambda i: (i, 0))]
    for a in flat_params:
        in_specs.append(pl.BlockSpec(a.shape, lambda i, _nd=a.ndim: (0,) * _nd))

    out_specs = pl.BlockSpec((tb, out_dim), lambda i: (i, 0))

    out = pl.pallas_call(
        _make_encoder_kernel(n_linears, z_dim),
        grid=(pl.cdiv(b_pad, tb),),
        in_specs=in_specs,
        out_specs=out_specs,
        out_shape=jax.ShapeDtypeStruct((b_pad, out_dim), jnp.float32),
        compiler_params=pltpu.CompilerParams(
            dimension_semantics=("parallel",),  # shard batch tiles across TCs (v7x)
        ),
    )(x, *flat_params)

    out = out[:B]
    # exp already applied to the std half inside the kernel; these slices are free.
    return out[:, :z_dim], out[:, z_dim:]


def init_params(key, x_dim, z_dim, q_z_nn_layers, q_z_nn_width):
    """Deterministic synthetic init matching FullyConnected layer shapes."""
    sizes = [x_dim] + q_z_nn_layers * [q_z_nn_width] + [2 * z_dim]
    params = []
    for fan_in, fan_out in zip(sizes[:-1], sizes[1:]):
        key, kw, kb = jax.random.split(key, 3)
        bound = 1.0 / jnp.sqrt(jnp.float32(fan_in))
        w = jax.random.uniform(kw, (fan_in, fan_out), jnp.float32, -bound, bound)
        b = jax.random.uniform(kb, (1, fan_out), jnp.float32, -bound, bound)
        params.append((w, b))
    return params


def encoder_reference(x, params, z_dim):
    """Pure-JAX reference of the same forward pass."""
    h = x
    n = len(params)
    for i, (w, b) in enumerate(params):
        h = h @ w + b
        if i < n - 1:
            h = jnp.where(h > 0, h, jnp.exp(jnp.minimum(h, 0.0)) - 1.0)
    return h[:, :z_dim], jnp.exp(h[:, z_dim:])


if __name__ == "__main__":
    # Small shapes consistent with the module: x_dim=32, z_dim=8, 2 hidden layers of width 32.
    B, X_DIM, Z_DIM = 8, 32, 8
    Q_Z_NN_LAYERS, Q_Z_NN_WIDTH = 2, 32

    key = jax.random.PRNGKey(0)
    key, kx = jax.random.split(key)
    x = jax.random.normal(kx, (B, X_DIM), jnp.float32)

    params = init_params(key, X_DIM, Z_DIM, Q_Z_NN_LAYERS, Q_Z_NN_WIDTH)

    z_pred, z_std = encoder_forward(x, params, Z_DIM)
    jax.block_until_ready((z_pred, z_std))

    # correctness check against pure-JAX reference
    ref_pred, ref_std = encoder_reference(x, params, Z_DIM)
    assert z_pred.shape == (B, Z_DIM) and z_std.shape == (B, Z_DIM)
    assert jnp.allclose(z_pred, ref_pred, atol=1e-5, rtol=1e-5)
    assert jnp.allclose(z_std, ref_std, atol=1e-5, rtol=1e-5)

    print("KERNEL_OK")
</pallas_src>

<mosaic_0001>
module attributes {stable_mosaic.version = 11 : i64} {
  func.func @kernel(%arg0: i32, %arg1: memref<8x32xf32, #tpu.memory_space<vmem>>, %arg2: memref<32x32xf32, #tpu.memory_space<vmem>>, %arg3: memref<1x32xf32, #tpu.memory_space<vmem>>, %arg4: memref<32x32xf32, #tpu.memory_space<vmem>>, %arg5: memref<1x32xf32, #tpu.memory_space<vmem>>, %arg6: memref<32x16xf32, #tpu.memory_space<vmem>>, %arg7: memref<1x16xf32, #tpu.memory_space<vmem>>, %arg8: memref<8x16xf32, #tpu.memory_space<vmem>>) attributes {dimension_semantics = [#tpu.dimension_semantics<parallel>], iteration_bounds = array<i64: 1>, scalar_prefetch = 0 : i64, scratch_operands = 0 : i64, tpu.core_type = #tpu.core_type<tc>, window_params = [{transform_indices = @transform_0, window_bounds = array<i64: 8, 32>}, {pipeline_mode = #tpu.pipeline_mode<synchronous>, transform_indices = @transform_1, window_bounds = array<i64: 32, 32>}, {pipeline_mode = #tpu.pipeline_mode<synchronous>, transform_indices = @transform_2, window_bounds = array<i64: 1, 32>}, {pipeline_mode = #tpu.pipeline_mode<synchronous>, transform_indices = @transform_3, window_bounds = array<i64: 32, 32>}, {pipeline_mode = #tpu.pipeline_mode<synchronous>, transform_indices = @transform_4, window_bounds = array<i64: 1, 32>}, {pipeline_mode = #tpu.pipeline_mode<synchronous>, transform_indices = @transform_5, window_bounds = array<i64: 32, 16>}, {pipeline_mode = #tpu.pipeline_mode<synchronous>, transform_indices = @transform_6, window_bounds = array<i64: 1, 16>}, {transform_indices = @transform_7, window_bounds = array<i64: 8, 16>}]} {
    %c0 = arith.constant 0 : index
    %c0_0 = arith.constant 0 : index
    %0 = vector.load %arg1[%c0, %c0_0] : memref<8x32xf32, #tpu.memory_space<vmem>>, vector<8x32xf32>
    %c0_1 = arith.constant 0 : index
    %c0_2 = arith.constant 0 : index
    %1 = vector.load %arg2[%c0_1, %c0_2] : memref<32x32xf32, #tpu.memory_space<vmem>>, vector<32x32xf32>
    %c0_3 = arith.constant 0 : index
    %c0_4 = arith.constant 0 : index
    %2 = vector.load %arg3[%c0_3, %c0_4] : memref<1x32xf32, #tpu.memory_space<vmem>>, vector<1x32xf32>
    %cst = arith.constant dense<0.000000e+00> : vector<8x32xf32>
    %3 = tpu.matmul %0, %1, %cst {dimension_numbers = #tpu.dot_dimension_numbers<[1], [0], [0], [1], [0, 0, 1, 1], [], []>} : vector<8x32xf32>, vector<32x32xf32>, vector<8x32xf32> -> vector<8x32xf32>
    %4 = vector.broadcast %2 : vector<1x32xf32> to vector<8x32xf32>
    %5 = arith.addf %3, %4 : vector<8x32xf32>
    %cst_5 = arith.constant 0.000000e+00 : f32
    %6 = vector.broadcast %cst_5 : f32 to vector<8x32xf32>
    %7 = arith.cmpf ogt, %5, %6 : vector<8x32xf32>
    %cst_6 = arith.constant 0.000000e+00 : f32
    %8 = vector.broadcast %cst_6 : f32 to vector<8x32xf32>
    %9 = arith.minimumf %5, %8 : vector<8x32xf32>
    %10 = math.exp %9 : vector<8x32xf32>
    %cst_7 = arith.constant 1.000000e+00 : f32
    %11 = vector.broadcast %cst_7 : f32 to vector<8x32xf32>
    %12 = arith.subf %10, %11 : vector<8x32xf32>
    %13 = arith.select %7, %5, %12 : vector<8x32xi1>, vector<8x32xf32>
    %c0_8 = arith.constant 0 : index
    %c0_9 = arith.constant 0 : index
    %14 = vector.load %arg4[%c0_8, %c0_9] : memref<32x32xf32, #tpu.memory_space<vmem>>, vector<32x32xf32>
    %c0_10 = arith.constant 0 : index
    %c0_11 = arith.constant 0 : index
    %15 = vector.load %arg5[%c0_10, %c0_11] : memref<1x32xf32, #tpu.memory_space<vmem>>, vector<1x32xf32>
    %cst_12 = arith.constant dense<0.000000e+00> : vector<8x32xf32>
    %16 = tpu.matmul %13, %14, %cst_12 {dimension_numbers = #tpu.dot_dimension_numbers<[1], [0], [0], [1], [0, 0, 1, 1], [], []>} : vector<8x32xf32>, vector<32x32xf32>, vector<8x32xf32> -> vector<8x32xf32>
    %17 = vector.broadcast %15 : vector<1x32xf32> to vector<8x32xf32>
    %18 = arith.addf %16, %17 : vector<8x32xf32>
    %cst_13 = arith.constant 0.000000e+00 : f32
    %19 = vector.broadcast %cst_13 : f32 to vector<8x32xf32>
    %20 = arith.cmpf ogt, %18, %19 : vector<8x32xf32>
    %cst_14 = arith.constant 0.000000e+00 : f32
    %21 = vector.broadcast %cst_14 : f32 to vector<8x32xf32>
    %22 = arith.minimumf %18, %21 : vector<8x32xf32>
    %23 = math.exp %22 : vector<8x32xf32>
    %cst_15 = arith.constant 1.000000e+00 : f32
    %24 = vector.broadcast %cst_15 : f32 to vector<8x32xf32>
    %25 = arith.subf %23, %24 : vector<8x32xf32>
    %26 = arith.select %20, %18, %25 : vector<8x32xi1>, vector<8x32xf32>
    %c0_16 = arith.constant 0 : index
    %c0_17 = arith.constant 0 : index
    %27 = vector.load %arg6[%c0_16, %c0_17] : memref<32x16xf32, #tpu.memory_space<vmem>>, vector<32x16xf32>
    %c0_18 = arith.constant 0 : index
    %c0_19 = arith.constant 0 : index
    %28 = vector.load %arg7[%c0_18, %c0_19] : memref<1x16xf32, #tpu.memory_space<vmem>>, vector<1x16xf32>
    %cst_20 = arith.constant dense<0.000000e+00> : vector<8x16xf32>
    %29 = tpu.matmul %26, %27, %cst_20 {dimension_numbers = #tpu.dot_dimension_numbers<[1], [0], [0], [1], [0, 0, 1, 1], [], []>} : vector<8x32xf32>, vector<32x16xf32>, vector<8x16xf32> -> vector<8x16xf32>
    %30 = vector.broadcast %28 : vector<1x16xf32> to vector<8x16xf32>
    %31 = arith.addf %29, %30 : vector<8x16xf32>
    %32 = tpu.iota {dimensions = array<i32: 1>} : vector<8x16xi32>
    %c8_i32 = arith.constant 8 : i32
    %33 = vector.broadcast %c8_i32 : i32 to vector<8x16xi32>
    %34 = arith.cmpi slt, %32, %33 : vector<8x16xi32>
    %35 = math.exp %31 : vector<8x16xf32>
    %36 = arith.select %34, %31, %35 : vector<8x16xi1>, vector<8x16xf32>
    %c0_21 = arith.constant 0 : index
    %c0_22 = arith.constant 0 : index
    %37 = vector.load %arg8[%c0_21, %c0_22] : memref<8x16xf32, #tpu.memory_space<vmem>>, vector<8x16xf32>
    tpu.vector_store %arg8[%c0_21, %c0_22], %36 {strides = array<i32>} : memref<8x16xf32, #tpu.memory_space<vmem>>, vector<8x16xf32>,
    return
  }
  func.func @transform_0(%arg0: i32) -> (i32, i32) {
    %c0_i32 = arith.constant 0 : i32
    %c0_i32_0 = arith.constant 0 : i32
    return %arg0, %c0_i32 : i32, i32
  }
  func.func @transform_1(%arg0: i32) -> (i32, i32) {
    %c0_i32 = arith.constant 0 : i32
    %c0_i32_0 = arith.constant 0 : i32
    %c0_i32_1 = arith.constant 0 : i32
    return %c0_i32, %c0_i32_0 : i32, i32
  }
  func.func @transform_2(%arg0: i32) -> (i32, i32) {
    %c0_i32 = arith.constant 0 : i32
    %c0_i32_0 = arith.constant 0 : i32
    %c0_i32_1 = arith.constant 0 : i32
    return %c0_i32, %c0_i32_0 : i32, i32
  }
  func.func @transform_3(%arg0: i32) -> (i32, i32) {
    %c0_i32 = arith.constant 0 : i32
    %c0_i32_0 = arith.constant 0 : i32
    %c0_i32_1 = arith.constant 0 : i32
    return %c0_i32, %c0_i32_0 : i32, i32
  }
  func.func @transform_4(%arg0: i32) -> (i32, i32) {
    %c0_i32 = arith.constant 0 : i32
    %c0_i32_0 = arith.constant 0 : i32
    %c0_i32_1 = arith.constant 0 : i32
    return %c0_i32, %c0_i32_0 : i32, i32
  }
  func.func @transform_5(%arg0: i32) -> (i32, i32) {
    %c0_i32 = arith.constant 0 : i32
    %c0_i32_0 = arith.constant 0 : i32
    %c0_i32_1 = arith.constant 0 : i32
    return %c0_i32, %c0_i32_0 : i32, i32
  }
  func.func @transform_6(%arg0: i32) -> (i32, i32) {
    %c0_i32 = arith.constant 0 : i32
    %c0_i32_0 = arith.constant 0 : i32
    %c0_i32_1 = arith.constant 0 : i32
    return %c0_i32, %c0_i32_0 : i32, i32
  }
  func.func @transform_7(%arg0: i32) -> (i32, i32) {
    %c0_i32 = arith.constant 0 : i32
    %c0_i32_0 = arith.constant 0 : i32
    return %arg0, %c0_i32 : i32, i32
  }
}

</mosaic_0001>

<llo_original>
// kernel: tpu_custom_call.1
$region0: #{tpu_custom_call.1}
  #allocation0 [shape = 'u32[]', space=smem, size = 0x4, offset = 0x4, fixed_abs, tag = 'smem constant byte address 0x4 - core index']
  #allocation1 [shape = 'u32[72,128]{1,0:T(1,128)}', space=vmem, size = 0x9000, scoped, tag = 'internal scratch']
  %s0 = inlined_call_operand.vmem [shape: f32[8,32], index: 0, kind: input, shape index: {}]
  %s1 = inlined_call_operand.vmem [shape: f32[32,32], index: 1, kind: input, shape index: {}]
  %s2 = inlined_call_operand.vmem [shape: f32[1,32], index: 2, kind: input, shape index: {}]
  %s3 = inlined_call_operand.hbm [shape: f32[32,32], index: 3, kind: input, shape index: {}]
  %s4 = inlined_call_operand.vmem [shape: f32[1,32], index: 4, kind: input, shape index: {}]
  %s5 = inlined_call_operand.vmem [shape: f32[32,16], index: 5, kind: input, shape index: {}]
  %s6 = inlined_call_operand.vmem [shape: f32[1,16], index: 6, kind: input, shape index: {}]
  %s7 = inlined_call_operand.hbm [shape: f32[8,16], index: 7, kind: output, shape index: {}]
  %s8 = sld [smem:[#allocation0]]
  $region42: #{tpu_custom_call.1} parent=0
    _
  %s10 = ssub.s32 1, %s8
  %s11 = scalar_select 0, %s10, %s8
  $region1: #{tpu_custom_call.1} parent=0
    #allocation2 [shape = 'u8[16384]{0}', space=vmem, size = 0x4000, scoped, tag = 'input window, operand 3, single buffered']
    #allocation3 [shape = 's32[1]{0}', space=sflag, size = 0x4, scoped, tag = 'scoped memory for tpu_custom_call.1']
    #allocation4 [shape = 's32[1]{0}', space=sflag, size = 0x4, scoped, tag = 'scoped memory for tpu_custom_call.1']
    #allocation5 [shape = 'u8[4096]{0}', space=vmem, size = 0x1000, scoped, tag = 'output window, operand 0, single buffered']
    %12 = vsyncpa [#allocation3], 0
    %13 = vsyncpa [#allocation4], 0
    // Predicated region
    $region2: #{tpu_custom_call.1} parent=1 // pred_check
      _
    $region3: #{tpu_custom_call.1} parent=1 // pred_check_branch
      %15 = sbr.rel (0) target = $region5
    $region4: #{tpu_custom_call.1} parent=1 // pred_region
      _
    $region5: #{tpu_custom_call.1} parent=1 // pred_fallthru
      _
    // Predicated region
    $region6: #{tpu_custom_call.1} parent=1 // pred_check
      _
    $region7: #{tpu_custom_call.1} parent=1 // pred_check_branch
      %17 = sbr.rel (0) target = $region9
    $region8: #{tpu_custom_call.1} parent=1 // pred_region
      _
    $region9: #{tpu_custom_call.1} parent=1 // pred_fallthru
      _
    // Predicated region
    $region10: #{tpu_custom_call.1} parent=1 // pred_check
      _
    $region11: #{tpu_custom_call.1} parent=1 // pred_check_branch
      %19 = sbr.rel (0) target = $region13
    $region12: #{tpu_custom_call.1} parent=1 // pred_region
      _
    $region13: #{tpu_custom_call.1} parent=1 // pred_fallthru
      _
    // Predicated region
    $region14: #{tpu_custom_call.1} parent=1 // pred_check
      _
    $region15: #{tpu_custom_call.1} parent=1 // pred_check_branch
      %21 = sbr.rel (0) target = $region17
    $region16: #{tpu_custom_call.1} parent=1 // pred_region
      %23 = vsyncadd [#allocation3], 0
      %s24 = sshll.u32 %s3, 4
      %s25 = int_to_ptr.hbm [resolvable:$true] %s24
      %s26 = sshll.u32 [#allocation2], 4
      %s27 = int_to_ptr.vmem [resolvable:$true] %s26
      %32 = dma.hbm_to_vmem [thread:$0]  %s25, 512, %s27, [#allocation3], 128, 128, 8
    $region17: #{tpu_custom_call.1} parent=1 // pred_fallthru
      _
    // Predicated region
    $region18: #{tpu_custom_call.1} parent=1 // pred_check
      _
    $region19: #{tpu_custom_call.1} parent=1 // pred_check_branch
      %34 = sbr.rel (0) target = $region21
    $region20: #{tpu_custom_call.1} parent=1 // pred_region
      _
    $region21: #{tpu_custom_call.1} parent=1 // pred_fallthru
      _
    // Predicated region
    $region22: #{tpu_custom_call.1} parent=1 // pred_check
      _
    $region23: #{tpu_custom_call.1} parent=1 // pred_check_branch
      %36 = sbr.rel (0) target = $region25
    $region24: #{tpu_custom_call.1} parent=1 // pred_region
      _
    $region25: #{tpu_custom_call.1} parent=1 // pred_fallthru
      _
    // Predicated region
    $region26: #{tpu_custom_call.1} parent=1 // pred_check
      _
    $region27: #{tpu_custom_call.1} parent=1 // pred_check_branch
      %38 = sbr.rel (0) target = $region29
    $region28: #{tpu_custom_call.1} parent=1 // pred_region
      _
    $region29: #{tpu_custom_call.1} parent=1 // pred_fallthru
      _
    // Predicated region
    $region30: #{tpu_custom_call.1} parent=1 // pred_check
      _
    $region31: #{tpu_custom_call.1} parent=1 // pred_check_branch
      %40 = sbr.rel (0) target = $region33
    $region32: #{tpu_custom_call.1} parent=1 // pred_region
      %42 = dma.done [#allocation3], 512
    $region33: #{tpu_custom_call.1} parent=1 // pred_fallthru
      _
    %v43 = vld [vmem:[%s0] sm:$0xff]
    %v44 = vld [vmem:[%s1] sm:$0xff]
    %v45 = vld [vmem:[%s1 + $0x8] sm:$0xff]
    %v46 = vld [vmem:[%s1 + $0x10] sm:$0xff]
    %v47 = vld [vmem:[%s1 + $0x18] sm:$0xff]
    %v48 = vld [vmem:[%s2] sm:$0x1]
    %v50 = vperm.slane %v48, 0
    %vm52 = vcmask 261120
    %v54 = vsel %vm52, %v43, 0
    %56 = vmatpush.msra.mxu0 0.0
    %57 = vmatpush.msra.mxu0 0.0
    %58 = vmatpush.msra.mxu0 0.0
    %59 = vmatpush.msra.mxu0 0.0
    %60 = vmatpush.msra.mxu0 0.0
    %61 = vmatpush.msra.mxu0 0.0
    %62 = vmatpush.msra.mxu0 0.0
    %63 = vmatpush.msra.mxu0 0.0
    %64 = vmatpush.msra.mxu0 0.0
    %65 = vmatpush.msra.mxu0 0.0
    %66 = vmatpush.msra.mxu0 0.0
    %67 = vmatpush.msra.mxu0 0.0
    %68 = vmatpush.msra.mxu0 %v47
    %69 = vmatpush.msra.mxu0 %v46
    %70 = vmatpush.msra.mxu0 %v45
    %71 = vmatpush.msra.mxu0 %v44
    %72 = vmatmul.f32.gmra.mxu0 %v54
    %v73 = vpop.f32.mrf.mxu0
    %v74 = vadd.f32 %v50, %v73
    %75 = vdwg.mxu0
    %vm76 = vcmp.gt.f32.partialorder %v74, 0.0
    %v77 = vmin.f32 %v74, 0.0
    %v78 = vmul.f32 %v77, 1.442695
    %v79 = vpow.pop %v78
    %v80 = vsub.f32 %v79, 1.0
    %v81 = vsel %vm76, %v74, %v80
    %v82 = vld [vmem:[#allocation2] sm:$0xff]
    %v83 = vld [vmem:[#allocation2 + $0x8] sm:$0xff]
    %v84 = vld [vmem:[#allocation2 + $0x10] sm:$0xff]
    %v85 = vld [vmem:[#allocation2 + $0x18] sm:$0xff]
    %v86 = vld [vmem:[%s4] sm:$0x1]
    %v88 = vperm.slane %v86, 0
    %v91 = vsel %vm52, %v81, 0
    %93 = vmatpush.msra.mxu0 0.0
    %94 = vmatpush.msra.mxu0 0.0
    %95 = vmatpush.msra.mxu0 0.0
    %96 = vmatpush.msra.mxu0 0.0
    %97 = vmatpush.msra.mxu0 0.0
    %98 = vmatpush.msra.mxu0 0.0
    %99 = vmatpush.msra.mxu0 0.0
    %100 = vmatpush.msra.mxu0 0.0
    %101 = vmatpush.msra.mxu0 0.0
    %102 = vmatpush.msra.mxu0 0.0
    %103 = vmatpush.msra.mxu0 0.0
    %104 = vmatpush.msra.mxu0 0.0
    %105 = vmatpush.msra.mxu0 %v85
    %106 = vmatpush.msra.mxu0 %v84
    %107 = vmatpush.msra.mxu0 %v83
    %108 = vmatpush.msra.mxu0 %v82
    %109 = vmatmul.f32.gmra.mxu0 %v91
    %v110 = vpop.f32.mrf.mxu0
    %v111 = vadd.f32 %v88, %v110
    %112 = vdwg.mxu0
    %vm113 = vcmp.gt.f32.partialorder %v111, 0.0
    %v114 = vmin.f32 %v111, 0.0
    %v115 = vmul.f32 %v114, 1.442695
    %v116 = vpow.pop %v115
    %v117 = vsub.f32 %v116, 1.0
    %v118 = vsel %vm113, %v111, %v117
    %v119 = vld [vmem:[%s5] sm:$0xff]
    %v120 = vld [vmem:[%s5 + $0x8] sm:$0xff]
    %v121 = vld [vmem:[%s5 + $0x10] sm:$0xff]
    %v122 = vld [vmem:[%s5 + $0x18] sm:$0xff]
    %v123 = vld [vmem:[%s6] sm:$0x1]
    %v125 = vperm.slane %v123, 0
    %v128 = vsel %vm52, %v118, 0
    %130 = vmatpush.msra.mxu0 0.0
    %131 = vmatpush.msra.mxu0 0.0
    %132 = vmatpush.msra.mxu0 0.0
    %133 = vmatpush.msra.mxu0 0.0
    %134 = vmatpush.msra.mxu0 0.0
    %135 = vmatpush.msra.mxu0 0.0
    %136 = vmatpush.msra.mxu0 0.0
    %137 = vmatpush.msra.mxu0 0.0
    %138 = vmatpush.msra.mxu0 0.0
    %139 = vmatpush.msra.mxu0 0.0
    %140 = vmatpush.msra.mxu0 0.0
    %141 = vmatpush.msra.mxu0 0.0
    %142 = vmatpush.msra.mxu0 %v122
    %143 = vmatpush.msra.mxu0 %v121
    %144 = vmatpush.msra.mxu0 %v120
    %145 = vmatpush.msra.mxu0 %v119
    %146 = vmatmul.f32.gmra.mxu0 %v128
    %v147 = vpop.f32.mrf.mxu0
    %v148 = vadd.f32 %v125, %v147
    %149 = vdwg.mxu0
    %v150 = vlaneseq
    %v151 = vand.u32 %v150, 127
    %vm152 = vcmp.lt.s32.totalorder %v151, 8
    %v153 = vmul.f32 %v148, 1.442695
    %v154 = vpow.pop %v153
    %v155 = vsel %vm152, %v148, %v154
    %vm156 = vcmask 130048
    %157 = vst.msk [vmem:[#allocation5] sm:$0xff] %vm156, %v155
    // Predicated region
    $region34: #{tpu_custom_call.1} parent=1 // pred_check
      _
    $region35: #{tpu_custom_call.1} parent=1 // pred_check_branch
      %159 = sbr.rel (0) target = $region37
    $region36: #{tpu_custom_call.1} parent=1 // pred_region
      %161 = vsyncadd [#allocation4], 0
      %s163 = sshll.u32 [#allocation5], 4
      %s164 = int_to_ptr.vmem [resolvable:$true] %s163
      %s165 = sshll.u32 %s7, 4
      %s166 = int_to_ptr.hbm [resolvable:$true] %s165
      %168 = dma.vmem_to_hbm [thread:$0]  %s164, 128, %s166, [#allocation4]
    $region37: #{tpu_custom_call.1} parent=1 // pred_fallthru
      _
    // Predicated region
    $region38: #{tpu_custom_call.1} parent=1 // pred_check
      _
    $region39: #{tpu_custom_call.1} parent=1 // pred_check_branch
      %170 = sbr.rel (0) target = $region41
    $region40: #{tpu_custom_call.1} parent=1 // pred_region
      %172 = dma.done [#allocation4], 128
    $region41: #{tpu_custom_call.1} parent=1 // pred_fallthru
      _
    %173 = vsyncpa [#allocation3], 1
    %174 = vsyncpa [#allocation4], 1

</llo_original>
